<compile_context>
chip_gen: v6e
topology: v6e:2x2x1
jax: 0.10.0
libtpu: 0.0.40
codegen_flags: <defaults>
</compile_context>

<pallas_src>
import jax
import jax.numpy as jnp
from jax import lax
from jax.experimental import pallas as pl
from jax.experimental.pallas import tpu as pltpu


def tied_weights_kernel(ids_ref, gram_ref, bias_ref, out_ref):
    # ids_ref : (TN, 1)   int32   -- flattened token indices (row tile)
    # gram_ref: (Vp, Vp)  float32 -- padded Gram matrix  G = E @ E.T
    # bias_ref: (1, Vp)   float32 -- padded linear bias
    # out_ref : (TN, Vp)  float32 -- padded logits for this row tile
    ids = ids_ref[...]                                     # (TN, 1)
    tn = ids.shape[0]
    vp = gram_ref.shape[0]

    # One-hot row-select of G on the MXU: (TN, Vp) @ (Vp, Vp) -> (TN, Vp).
    vocab_iota = lax.broadcasted_iota(jnp.int32, (tn, vp), 1)
    onehot = (ids == vocab_iota).astype(jnp.float32)
    logits = jnp.dot(onehot, gram_ref[...],
                     preferred_element_type=jnp.float32) + bias_ref[...]
    out_ref[...] = logits.astype(out_ref.dtype)


def tied_weights_forward(input_vec, embedding, bias):
    """input_vec: (B, S) int; embedding: (V, D) f32; bias: (V,) f32 -> (B, S, V) f32."""
    B, S = input_vec.shape
    V, D = embedding.shape
    N = B * S

    # ---- wrapper-side prep (plain XLA, tiny) -------------------------------
    embedding = embedding.astype(jnp.float32)
    # Gram matrix: fuses gather-projection into a single kernel matmul.
    gram = jnp.dot(embedding, embedding.T,
                   preferred_element_type=jnp.float32)        # (V, V)

    # Pad vocab to a multiple of 128 for lane-dense MXU / stores.
    Vp = pl.cdiv(V, 128) * 128
    gram_p = jnp.zeros((Vp, Vp), jnp.float32).at[:V, :V].set(gram)
    bias_p = jnp.zeros((1, Vp), jnp.float32).at[0, :V].set(
        bias.astype(jnp.float32))

    # Row tiling: multiple of 8, capped at 512; pad N so tiles are uniform.
    N8 = pl.cdiv(N, 8) * 8
    TN = min(512, N8)
    Np = pl.cdiv(N, TN) * TN
    ids_p = jnp.zeros((Np, 1), jnp.int32).at[:N, 0].set(
        input_vec.reshape(N).astype(jnp.int32))

    grid = (Np // TN,)

    out = pl.pallas_call(
        tied_weights_kernel,
        out_shape=jax.ShapeDtypeStruct((Np, Vp), jnp.float32),
        grid_spec=pltpu.PrefetchScalarGridSpec(
            num_scalar_prefetch=0,
            grid=grid,
            in_specs=[
                pl.BlockSpec((TN, 1), lambda i: (i, 0)),    # ids row tile
                pl.BlockSpec((Vp, Vp), lambda i: (0, 0)),   # Gram (pinned)
                pl.BlockSpec((1, Vp), lambda i: (0, 0)),    # bias (pinned)
            ],
            out_specs=pl.BlockSpec((TN, Vp), lambda i: (i, 0)),
        ),
        compiler_params=pltpu.CompilerParams(
            dimension_semantics=("parallel",)),
    )(ids_p, gram_p, bias_p)

    # Drop row/vocab padding and restore (B, S, V).
    return out[:N, :V].reshape(B, S, V)


if __name__ == "__main__":
    VOCAB, DIM = 100, 10
    B, S = 2, 8

    key = jax.random.PRNGKey(0)
    k_emb, k_bias, k_ids = jax.random.split(key, 3)

    # Deterministic params: nn.Embedding(100,10).weight shared with
    # Linear(10,100).weight; Linear bias separate.
    embedding = jax.random.normal(k_emb, (VOCAB, DIM), dtype=jnp.float32)
    bias = jax.random.normal(k_bias, (VOCAB,), dtype=jnp.float32) * 0.1

    input_vec = jax.random.randint(k_ids, (B, S), 0, VOCAB, dtype=jnp.int32)

    logits = tied_weights_forward(input_vec, embedding, bias)
    logits = jax.block_until_ready(logits)

    # Reference: tied-weights forward in pure JAX.
    ref = embedding[input_vec] @ embedding.T + bias
    assert logits.shape == (B, S, VOCAB)
    assert jnp.allclose(logits, ref, atol=1e-4, rtol=1e-4)

    print("KERNEL_OK")
</pallas_src>

<mosaic_0001>
module attributes {stable_mosaic.version = 11 : i64} {
  func.func @tied_weights_kernel(%arg0: i32, %arg1: memref<16x1xi32, #tpu.memory_space<vmem>>, %arg2: memref<128x128xf32, #tpu.memory_space<vmem>>, %arg3: memref<1x128xf32, #tpu.memory_space<vmem>>, %arg4: memref<16x128xf32, #tpu.memory_space<vmem>>) attributes {dimension_semantics = [#tpu.dimension_semantics<parallel>], iteration_bounds = array<i64: 1>, scalar_prefetch = 0 : i64, scratch_operands = 0 : i64, tpu.core_type = #tpu.core_type<tc>, window_params = [{transform_indices = @transform_0, window_bounds = array<i64: 16, 1>}, {pipeline_mode = #tpu.pipeline_mode<synchronous>, transform_indices = @transform_1, window_bounds = array<i64: 128, 128>}, {pipeline_mode = #tpu.pipeline_mode<synchronous>, transform_indices = @transform_2, window_bounds = array<i64: 1, 128>}, {transform_indices = @transform_3, window_bounds = array<i64: 16, 128>}]} {
    %c0 = arith.constant 0 : index
    %c0_0 = arith.constant 0 : index
    %0 = vector.load %arg1[%c0, %c0_0] : memref<16x1xi32, #tpu.memory_space<vmem>>, vector<16x1xi32>
    %1 = tpu.iota {dimensions = array<i32: 1>} : vector<16x128xi32>
    %2 = vector.broadcast %0 : vector<16x1xi32> to vector<16x128xi32>
    %3 = arith.cmpi eq, %2, %1 : vector<16x128xi32>
    %4 = arith.extui %3 : vector<16x128xi1> to vector<16x128xi32>
    %5 = arith.sitofp %4 : vector<16x128xi32> to vector<16x128xf32>
    %c0_1 = arith.constant 0 : index
    %c0_2 = arith.constant 0 : index
    %6 = vector.load %arg2[%c0_1, %c0_2] : memref<128x128xf32, #tpu.memory_space<vmem>>, vector<128x128xf32>
    %cst = arith.constant dense<0.000000e+00> : vector<16x128xf32>
    %7 = tpu.matmul %5, %6, %cst {dimension_numbers = #tpu.dot_dimension_numbers<[1], [0], [0], [1], [0, 0, 1, 1], [], []>} : vector<16x128xf32>, vector<128x128xf32>, vector<16x128xf32> -> vector<16x128xf32>
    %c0_3 = arith.constant 0 : index
    %c0_4 = arith.constant 0 : index
    %8 = vector.load %arg3[%c0_3, %c0_4] : memref<1x128xf32, #tpu.memory_space<vmem>>, vector<1x128xf32>
    %9 = vector.broadcast %8 : vector<1x128xf32> to vector<16x128xf32>
    %10 = arith.addf %7, %9 : vector<16x128xf32>
    %c0_5 = arith.constant 0 : index
    %c0_6 = arith.constant 0 : index
    %11 = vector.load %arg4[%c0_5, %c0_6] : memref<16x128xf32, #tpu.memory_space<vmem>>, vector<16x128xf32>
    tpu.vector_store %arg4[%c0_5, %c0_6], %10 {strides = array<i32>} : memref<16x128xf32, #tpu.memory_space<vmem>>, vector<16x128xf32>,
    return
  }
  func.func @transform_0(%arg0: i32) -> (i32, i32) {
    %c0_i32 = arith.constant 0 : i32
    %c0_i32_0 = arith.constant 0 : i32
    return %arg0, %c0_i32 : i32, i32
  }
  func.func @transform_1(%arg0: i32) -> (i32, i32) {
    %c0_i32 = arith.constant 0 : i32
    %c0_i32_0 = arith.constant 0 : i32
    %c0_i32_1 = arith.constant 0 : i32
    return %c0_i32, %c0_i32_0 : i32, i32
  }
  func.func @transform_2(%arg0: i32) -> (i32, i32) {
    %c0_i32 = arith.constant 0 : i32
    %c0_i32_0 = arith.constant 0 : i32
    %c0_i32_1 = arith.constant 0 : i32
    return %c0_i32, %c0_i32_0 : i32, i32
  }
  func.func @transform_3(%arg0: i32) -> (i32, i32) {
    %c0_i32 = arith.constant 0 : i32
    %c0_i32_0 = arith.constant 0 : i32
    return %arg0, %c0_i32 : i32, i32
  }
}

</mosaic_0001>

<llo_original>
// kernel: tpu_custom_call.1
$region0: #{tpu_custom_call.1}
  #allocation0 [shape = 'u32[]', space=smem, size = 0x4, offset = 0x4, fixed_abs, tag = 'smem constant byte address 0x4 - core index']
  #allocation1 [shape = 'u32[144,128]{1,0:T(1,128)}', space=vmem, size = 0x12000, scoped, tag = 'internal scratch']
  %s0 = inlined_call_operand.vmem [shape: s32[16,1], index: 0, kind: input, shape index: {}]
  %s1 = inlined_call_operand.hbm [shape: f32[128,128], index: 1, kind: input, shape index: {}]
  %s2 = inlined_call_operand.vmem [shape: f32[1,128], index: 2, kind: input, shape index: {}]
  %s3 = inlined_call_operand.hbm [shape: f32[16,128], index: 3, kind: output, shape index: {}]
  %s4 = sld [smem:[#allocation0]]
  $region26: #{tpu_custom_call.1} parent=0
    _
  %s6 = ssub.s32 1, %s4
  %s7 = scalar_select 0, %s6, %s4
  $region1: #{tpu_custom_call.1} parent=0
    #allocation2 [shape = 'u8[65536]{0}', space=vmem, size = 0x10000, scoped, tag = 'input window, operand 1, single buffered']
    #allocation3 [shape = 's32[1]{0}', space=sflag, size = 0x4, scoped, tag = 'scoped memory for tpu_custom_call.1']
    #allocation4 [shape = 's32[1]{0}', space=sflag, size = 0x4, scoped, tag = 'scoped memory for tpu_custom_call.1']
    #allocation5 [shape = 'u8[8192]{0}', space=vmem, size = 0x2000, scoped, tag = 'output window, operand 0, single buffered']
    %8 = vsyncpa [#allocation3], 0
    %9 = vsyncpa [#allocation4], 0
    // Predicated region
    $region2: #{tpu_custom_call.1} parent=1 // pred_check
      _
    $region3: #{tpu_custom_call.1} parent=1 // pred_check_branch
      %11 = sbr.rel (0) target = $region5
    $region4: #{tpu_custom_call.1} parent=1 // pred_region
      _
    $region5: #{tpu_custom_call.1} parent=1 // pred_fallthru
      _
    // Predicated region
    $region6: #{tpu_custom_call.1} parent=1 // pred_check
      _
    $region7: #{tpu_custom_call.1} parent=1 // pred_check_branch
      %13 = sbr.rel (0) target = $region9
    $region8: #{tpu_custom_call.1} parent=1 // pred_region
      %s15 = ssub.s32 2048, 2048
      %16 = vsyncadd [#allocation3], %s15
      %s17 = sshll.u32 [#allocation2], 4
      %s18 = int_to_ptr.vmem [resolvable:$true] %s17
      %23 = dma.hbm_to_vmem [thread:$0]  %s1, 2048, %s18, [#allocation3], 128, 128, 8
    $region9: #{tpu_custom_call.1} parent=1 // pred_fallthru
      _
    // Predicated region
    $region10: #{tpu_custom_call.1} parent=1 // pred_check
      _
    $region11: #{tpu_custom_call.1} parent=1 // pred_check_branch
      %25 = sbr.rel (0) target = $region13
    $region12: #{tpu_custom_call.1} parent=1 // pred_region
      _
    $region13: #{tpu_custom_call.1} parent=1 // pred_fallthru
      _
    // Predicated region
    $region14: #{tpu_custom_call.1} parent=1 // pred_check
      _
    $region15: #{tpu_custom_call.1} parent=1 // pred_check_branch
      %27 = sbr.rel (0) target = $region17
    $region16: #{tpu_custom_call.1} parent=1 // pred_region
      %28 = dma.done [#allocation3], 2048
    $region17: #{tpu_custom_call.1} parent=1 // pred_fallthru
      _
    %v29 = vld [vmem:[%s0] sm:$0xff]
    %v30 = vld [vmem:[%s0 + $0x8] sm:$0xff]
    %v31 = vlaneseq
    %v32 = vand.u32 %v31, 127
    %33 = vset.pattern.permute.xlu0 0
    %34 = vperm.xlu0 %33, %v29
    %v35 = vpop.permute.xlu0 %34
    %36 = vset.pattern.permute.xlu0 0
    %37 = vperm.xlu0 %36, %v30
    %v38 = vpop.permute.xlu0 %37
    %vm39 = vcmp.eq.s32.totalorder %v35, %v32
    %vm40 = vcmp.eq.s32.totalorder %v38, %v32
    %v41 = vsel %vm39, 1, 0
    %v42 = vsel %vm40, 1, 0
    %v43 = vcvt.s32.f32 %v41
    %v44 = vcvt.s32.f32 %v42
    %v45 = vld [vmem:[#allocation2] sm:$0xff]
    %v46 = vld [vmem:[#allocation2 + $0x8] sm:$0xff]
    %v47 = vld [vmem:[#allocation2 + $0x10] sm:$0xff]
    %v48 = vld [vmem:[#allocation2 + $0x18] sm:$0xff]
    %v49 = vld [vmem:[#allocation2 + $0x20] sm:$0xff]
    %v50 = vld [vmem:[#allocation2 + $0x28] sm:$0xff]
    %v51 = vld [vmem:[#allocation2 + $0x30] sm:$0xff]
    %v52 = vld [vmem:[#allocation2 + $0x38] sm:$0xff]
    %v53 = vld [vmem:[#allocation2 + $0x40] sm:$0xff]
    %v54 = vld [vmem:[#allocation2 + $0x48] sm:$0xff]
    %v55 = vld [vmem:[#allocation2 + $0x50] sm:$0xff]
    %v56 = vld [vmem:[#allocation2 + $0x58] sm:$0xff]
    %v57 = vld [vmem:[#allocation2 + $0x60] sm:$0xff]
    %v58 = vld [vmem:[#allocation2 + $0x68] sm:$0xff]
    %v59 = vld [vmem:[#allocation2 + $0x70] sm:$0xff]
    %v60 = vld [vmem:[#allocation2 + $0x78] sm:$0xff]
    %v61 = vld [vmem:[%s2] sm:$0x1]
    %v63 = vlaneseq
    %v64 = vshrl.u32 %v63, 7
    %v65 = vsub.s32 0, %v64
    %v66 = vrot.slane %v61, %v65
    %68 = vmatprep.subr.mxu0 0.0
    %69 = vmatpush1.msra.mxu0 %v60
    %70 = vmatprep.subr.mxu0 0.0
    %71 = vmatpush1.msra.mxu0 %v59
    %72 = vmatprep.subr.mxu0 0.0
    %73 = vmatpush1.msra.mxu0 %v58
    %74 = vmatprep.subr.mxu0 0.0
    %75 = vmatpush1.msra.mxu0 %v57
    %76 = vmatprep.subr.mxu0 0.0
    %77 = vmatpush1.msra.mxu0 %v56
    %78 = vmatprep.subr.mxu0 0.0
    %79 = vmatpush1.msra.mxu0 %v55
    %80 = vmatprep.subr.mxu0 0.0
    %81 = vmatpush1.msra.mxu0 %v54
    %82 = vmatprep.subr.mxu0 0.0
    %83 = vmatpush1.msra.mxu0 %v53
    %84 = vmatprep.subr.mxu0 0.0
    %85 = vmatpush1.msra.mxu0 %v52
    %86 = vmatprep.subr.mxu0 0.0
    %87 = vmatpush1.msra.mxu0 %v51
    %88 = vmatprep.subr.mxu0 0.0
    %89 = vmatpush1.msra.mxu0 %v50
    %90 = vmatprep.subr.mxu0 0.0
    %91 = vmatpush1.msra.mxu0 %v49
    %92 = vmatprep.subr.mxu0 0.0
    %93 = vmatpush1.msra.mxu0 %v48
    %94 = vmatprep.subr.mxu0 0.0
    %95 = vmatpush1.msra.mxu0 %v47
    %96 = vmatprep.subr.mxu0 0.0
    %97 = vmatpush1.msra.mxu0 %v46
    %98 = vmatprep.subr.mxu0 0.0
    %99 = vmatpush1.msra.mxu0 %v45
    %100 = vmatprep.subr.mxu0 0.0
    %101 = vmatpush2.msra.mxu0 0.0
    %102 = vmatprep.subr.mxu0 0.0
    %103 = vmatpush2.msra.mxu0 0.0
    %104 = vmatprep.subr.mxu0 0.0
    %105 = vmatpush2.msra.mxu0 0.0
    %106 = vmatprep.subr.mxu0 0.0
    %107 = vmatpush2.msra.mxu0 0.0
    %108 = vmatprep.subr.mxu0 0.0
    %109 = vmatpush2.msra.mxu0 0.0
    %110 = vmatprep.subr.mxu0 0.0
    %111 = vmatpush2.msra.mxu0 0.0
    %112 = vmatprep.subr.mxu0 0.0
    %113 = vmatpush2.msra.mxu0 0.0
    %114 = vmatprep.subr.mxu0 0.0
    %115 = vmatpush2.msra.mxu0 0.0
    %116 = vmatprep.subr.mxu0 0.0
    %117 = vmatpush2.msra.mxu0 0.0
    %118 = vmatprep.subr.mxu0 0.0
    %119 = vmatpush2.msra.mxu0 0.0
    %120 = vmatprep.subr.mxu0 0.0
    %121 = vmatpush2.msra.mxu0 0.0
    %122 = vmatprep.subr.mxu0 0.0
    %123 = vmatpush2.msra.mxu0 0.0
    %124 = vmatprep.subr.mxu0 0.0
    %125 = vmatpush2.msra.mxu0 0.0
    %126 = vmatprep.subr.mxu0 0.0
    %127 = vmatpush2.msra.mxu0 0.0
    %128 = vmatprep.subr.mxu0 0.0
    %129 = vmatpush2.msra.mxu0 0.0
    %130 = vmatprep.subr.mxu0 0.0
    %131 = vmatpush2.msra.mxu0 0.0
    %132 = vmatprep.mubr.f32.mxu0 0.0
    %133 = vmatmul.mubr.f32.gmra.mxu0 %v43
    %v134 = vpop.f32.mrf.mxu0
    %v135 = vadd.f32 %v66, %v134
    %v136 = vpop.f32.mrf.mxu0
    %137 = vmatprep.mubr.f32.mxu0 0.0
    %138 = vmatmul.mubr.f32.gmra.mxu0 %v44
    %v139 = vpop.f32.mrf.mxu0
    %v140 = vadd.f32 %v66, %v139
    %v141 = vpop.f32.mrf.mxu0
    %142 = vdwg.mxu0
    %143 = vst [vmem:[#allocation5] sm:$0xff] %v135
    %144 = vst [vmem:[#allocation5 + $0x8] sm:$0xff] %v140
    // Predicated region
    $region18: #{tpu_custom_call.1} parent=1 // pred_check
      _
    $region19: #{tpu_custom_call.1} parent=1 // pred_check_branch
      %146 = sbr.rel (0) target = $region21
    $region20: #{tpu_custom_call.1} parent=1 // pred_region
      %s148 = ssub.s32 256, 256
      %149 = vsyncadd [#allocation4], %s148
      %s150 = sshll.u32 [#allocation5], 4
      %s151 = int_to_ptr.vmem [resolvable:$true] %s150
      %156 = dma.vmem_to_hbm [thread:$0]  %s151, 256, %s3, [#allocation4], 128, 128, 8
    $region21: #{tpu_custom_call.1} parent=1 // pred_fallthru
      _
    // Predicated region
    $region22: #{tpu_custom_call.1} parent=1 // pred_check
      _
    $region23: #{tpu_custom_call.1} parent=1 // pred_check_branch
      %158 = sbr.rel (0) target = $region25
    $region24: #{tpu_custom_call.1} parent=1 // pred_region
      %159 = dma.done [#allocation4], 256
    $region25: #{tpu_custom_call.1} parent=1 // pred_fallthru
      _
    %160 = vsyncpa [#allocation3], 1
    %161 = vsyncpa [#allocation4], 1

</llo_original>
